<compile_context>
chip_gen: v7x
topology: tpu7x:2x2x1
jax: 0.10.0
libtpu: 0.0.40
codegen_flags: <defaults>
</compile_context>

<pallas_src>
import functools

import jax
import jax.numpy as jnp
from jax.experimental import pallas as pl
from jax.experimental.pallas import tpu as pltpu

_LANE = 128
_MiB = 1024 * 1024


def _round_up(v, m):
    return (v + m - 1) // m * m


def _vmem_capacity_bytes():
    try:
        return int(pltpu.get_tpu_info().vmem_capacity_bytes)
    except Exception:
        return 128 * _MiB  # safe default: v5e/v6e class


def _layer_norm(z, gamma, beta, d_model_true, eps):
    """Row LayerNorm over the true d_model (padded columns of z are zero)."""
    inv_d = 1.0 / float(d_model_true)
    row_sum = jnp.sum(z, axis=-1, keepdims=True)
    row_sumsq = jnp.sum(z * z, axis=-1, keepdims=True)
    mean = row_sum * inv_d
    var = jnp.maximum(row_sumsq * inv_d - mean * mean, 0.0)
    zn = (z - mean) * jax.lax.rsqrt(var + eps)
    return zn * gamma + beta


# --------------------------------------------------------------------------
# Kernels
# --------------------------------------------------------------------------
def _ffn_ln_resident_kernel(x_ref, w1_ref, b1_ref, w2_ref, b2_ref, g_ref,
                            beta_ref, o_ref, *, d_model_true, eps):
    """Whole d_ffn resident in VMEM; one grid axis over row tiles."""
    x = x_ref[...]                                           # (TILE_N, Dm) f32

    # Linear1 + fused ReLU->bf16: only the bf16 copy of h stays live.
    h = jnp.dot(x.astype(jnp.bfloat16), w1_ref[...],
                preferred_element_type=jnp.float32) + b1_ref[...]
    h = jnp.maximum(h, 0.0).astype(jnp.bfloat16)             # (TILE_N, Dffn)

    # Linear2 (bf16 operands, f32 acc), dropout(eval)=identity, residual, LN.
    y = jnp.dot(h, w2_ref[...], preferred_element_type=jnp.float32) + b2_ref[...]
    z = x + y
    o_ref[...] = _layer_norm(z, g_ref[...], beta_ref[...],
                             d_model_true, eps).astype(o_ref.dtype)


def _ffn_ln_tiled_kernel(x_ref, w1_ref, b1_ref, w2_ref, b2_ref, g_ref,
                         beta_ref, o_ref, acc_ref, *, d_model_true, eps):
    """d_ffn streamed in chunks (innermost 'arbitrary' grid axis); f32 acc."""
    f = pl.program_id(1)

    @pl.when(f == 0)
    def _():
        acc_ref[...] = jnp.zeros_like(acc_ref)

    h = jnp.dot(x_ref[...].astype(jnp.bfloat16), w1_ref[...],
                preferred_element_type=jnp.float32) + b1_ref[...]
    h = jnp.maximum(h, 0.0).astype(jnp.bfloat16)             # (TILE_N, TILE_F)
    acc_ref[...] += jnp.dot(h, w2_ref[...], preferred_element_type=jnp.float32)

    @pl.when(f == pl.num_programs(1) - 1)
    def _():
        z = x_ref[...] + acc_ref[...] + b2_ref[...]
        o_ref[...] = _layer_norm(z, g_ref[...], beta_ref[...],
                                 d_model_true, eps).astype(o_ref.dtype)


# --------------------------------------------------------------------------
# Host-side wrapper
# --------------------------------------------------------------------------
def prepare_params(w1, b1, w2, b2, gamma, beta):
    """Pad + bf16-cast FFN parameters once (hoist out of the per-call path)."""
    d_model, d_ffn = w1.shape
    dm_pad = _round_up(d_model, _LANE)
    dff_pad = _round_up(d_ffn, _LANE)
    if d_model == dm_pad and d_ffn == dff_pad:
        # Already lane-aligned: no extra HBM pad copies, just casts/reshapes.
        w1_p = w1.astype(jnp.bfloat16)
        w2_p = w2.astype(jnp.bfloat16)
        b1_p = b1.astype(jnp.float32).reshape(1, dff_pad)
        b2_p = b2.astype(jnp.float32).reshape(1, dm_pad)
        g_p = gamma.astype(jnp.float32).reshape(1, dm_pad)
        be_p = beta.astype(jnp.float32).reshape(1, dm_pad)
    else:
        w1_p = jnp.zeros((dm_pad, dff_pad), jnp.bfloat16).at[:d_model, :d_ffn].set(
            w1.astype(jnp.bfloat16))
        w2_p = jnp.zeros((dff_pad, dm_pad), jnp.bfloat16).at[:d_ffn, :d_model].set(
            w2.astype(jnp.bfloat16))
        b1_p = jnp.zeros((1, dff_pad), jnp.float32).at[0, :d_ffn].set(b1)
        b2_p = jnp.zeros((1, dm_pad), jnp.float32).at[0, :d_model].set(b2)
        g_p = jnp.zeros((1, dm_pad), jnp.float32).at[0, :d_model].set(gamma)
        be_p = jnp.zeros((1, dm_pad), jnp.float32).at[0, :d_model].set(beta)
    return dict(w1=w1_p, b1=b1_p, w2=w2_p, b2=b2_p, gamma=g_p, beta=be_p,
                d_model=d_model, d_ffn=d_ffn)


def feed_forward_net(x, w1=None, b1=None, w2=None, b2=None, gamma=None,
                     beta=None, *, params=None, tile_n=None, tile_f=512,
                     eps=1e-5, force_ffn_tiling=False):
    """x: (batch, seq, d_model) float32. Returns the same shape."""
    if params is None:
        params = prepare_params(w1, b1, w2, b2, gamma, beta)
    batch, seq, d_model = x.shape
    assert d_model == params["d_model"], "d_model mismatch between x and params"
    d_ffn = params["d_ffn"]
    w1_p, b1_p, w2_p = params["w1"], params["b1"], params["w2"]
    b2_p, g_p, be_p = params["b2"], params["gamma"], params["beta"]
    dm_pad, dff_pad = w1_p.shape
    n = batch * seq

    # ---- generation-aware knobs -------------------------------------------
    vmem_cap = _vmem_capacity_bytes()
    small_vmem = vmem_cap < 96 * _MiB          # v7x class: 64 MiB/TC, 2 TCs/chip
    vmem_usable = int(min(100 * _MiB, vmem_cap - 8 * _MiB))   # Mosaic headroom

    user_tile_n = tile_n is not None
    if tile_n is None:
        # 128-MiB chips (v5e/v6e): bigger row tiles amortize per-step overhead;
        # 64-MiB chips (v7x): stay conservative.
        tile_n = 256 if small_vmem else 512
    tile_n = max(8, min(tile_n, _round_up(n, 8)))

    def _resident_bytes(tn):
        return (2 * 2 * tn * dm_pad * 4            # x + out tiles, double-buffered
                + 2 * dm_pad * dff_pad * 2         # bf16 W1 + W2, single-buffered
                + (2 * dff_pad + 3 * dm_pad) * 4   # biases + LN params
                + tn * dff_pad * (4 + 2)           # h in f32 then bf16
                + 3 * tn * dm_pad * 4)             # residual / LN temps

    def _tiled_bytes(tn, tf):
        return (2 * 2 * tn * dm_pad * 4            # x + out tiles, double-buffered
                + 2 * 2 * dm_pad * tf * 2          # streamed W1/W2 chunks, 2-buf
                + 2 * (2 * tf + 3 * dm_pad) * 4    # b1 chunk + b2/gamma/beta
                + tn * dm_pad * 4                  # f32 accumulator scratch
                + tn * tf * (4 + 2)                # h chunk f32 then bf16
                + 3 * tn * dm_pad * 4)             # residual / LN temps

    use_ffn_tiling = (force_ffn_tiling
                      or _resident_bytes(tile_n) > int(0.9 * vmem_usable))

    if use_ffn_tiling:
        if not user_tile_n:
            # Weights stream from HBM: arithmetic intensity ~= tile_n flop per
            # weight byte, so keep it above the ~620 flop/B HBM ridge.
            tile_n = min(640, _round_up(n, 8))
        # tile_f must evenly divide dff_pad so every streamed chunk is full.
        d = dff_pad // _LANE
        candidates = sorted({m * _LANE for m in range(1, d + 1) if d % m == 0},
                            reverse=True)
        desired = max(_LANE, min(tile_f, dff_pad))
        tile_f = next((c for c in candidates if c <= desired), _LANE)
        while _tiled_bytes(tile_n, tile_f) > int(0.9 * vmem_usable):
            smaller = [c for c in candidates if c < tile_f]
            if smaller:
                tile_f = smaller[0]
            elif tile_n > 64:
                tile_n = max(64, _round_up(tile_n // 2, 8))
            else:
                break
        grid_f = dff_pad // tile_f
        vmem_bytes = _tiled_bytes(tile_n, tile_f)
    else:
        grid_f = 1
        vmem_bytes = _resident_bytes(tile_n)

    # Even number of row tiles on v7x-class chips (2 TensorCores share the
    # 'parallel' axis); plain tile_n alignment elsewhere.
    row_align = 2 * tile_n if small_vmem else tile_n
    n_pad = _round_up(n, row_align)
    grid_n = n_pad // tile_n

    # ---- input staging (skip pad copies when already aligned) --------------
    aligned_io = (n_pad == n and dm_pad == d_model)
    if aligned_io:
        x2 = x.reshape(n, d_model)
    else:
        x2 = jnp.zeros((n_pad, dm_pad), x.dtype).at[:n, :d_model].set(
            x.reshape(n, d_model))

    vmem_limit = int(min(vmem_usable, max(16 * _MiB, int(1.5 * vmem_bytes))))

    cost = pl.CostEstimate(
        flops=4 * n_pad * dm_pad * dff_pad,
        transcendentals=n_pad,
        bytes_accessed=(2 * n_pad * dm_pad * 4            # x in + out
                        + 2 * dm_pad * dff_pad * 2        # bf16 weights
                        + (2 * dff_pad + 3 * dm_pad) * 4),
    )

    out_shape = jax.ShapeDtypeStruct((n_pad, dm_pad), x.dtype)
    kernel_kwargs = dict(d_model_true=d_model, eps=eps)

    def _run(single_buffer_resident):
        def _const_spec(shape, index_map):
            # Operands whose block index never changes: keep a single VMEM
            # buffer instead of the default double buffer.
            if single_buffer_resident:
                return pl.BlockSpec(shape, index_map,
                                    pipeline_mode=pl.Buffered(1))
            return pl.BlockSpec(shape, index_map)

        if not use_ffn_tiling:
            kernel = functools.partial(_ffn_ln_resident_kernel, **kernel_kwargs)
            grid_spec = pltpu.PrefetchScalarGridSpec(
                num_scalar_prefetch=0,
                grid=(grid_n,),
                in_specs=[
                    pl.BlockSpec((tile_n, dm_pad), lambda i: (i, 0)),     # x tile
                    _const_spec((dm_pad, dff_pad), lambda i: (0, 0)),     # W1
                    _const_spec((1, dff_pad), lambda i: (0, 0)),          # b1
                    _const_spec((dff_pad, dm_pad), lambda i: (0, 0)),     # W2
                    _const_spec((1, dm_pad), lambda i: (0, 0)),           # b2
                    _const_spec((1, dm_pad), lambda i: (0, 0)),           # gamma
                    _const_spec((1, dm_pad), lambda i: (0, 0)),           # beta
                ],
                out_specs=pl.BlockSpec((tile_n, dm_pad), lambda i: (i, 0)),
            )
            dim_sem = ("parallel",)
        else:
            kernel = functools.partial(_ffn_ln_tiled_kernel, **kernel_kwargs)
            grid_spec = pltpu.PrefetchScalarGridSpec(
                num_scalar_prefetch=0,
                grid=(grid_n, grid_f),
                in_specs=[
                    pl.BlockSpec((tile_n, dm_pad), lambda i, f: (i, 0)),  # x tile
                    pl.BlockSpec((dm_pad, tile_f), lambda i, f: (0, f)),  # W1 chunk
                    pl.BlockSpec((1, tile_f), lambda i, f: (0, f)),       # b1 chunk
                    pl.BlockSpec((tile_f, dm_pad), lambda i, f: (f, 0)),  # W2 chunk
                    _const_spec((1, dm_pad), lambda i, f: (0, 0)),        # b2
                    _const_spec((1, dm_pad), lambda i, f: (0, 0)),        # gamma
                    _const_spec((1, dm_pad), lambda i, f: (0, 0)),        # beta
                ],
                out_specs=pl.BlockSpec((tile_n, dm_pad), lambda i, f: (i, 0)),
                scratch_shapes=[pltpu.VMEM((tile_n, dm_pad), jnp.float32)],
            )
            dim_sem = ("parallel", "arbitrary")

        return pl.pallas_call(
            kernel,
            out_shape=out_shape,
            grid_spec=grid_spec,
            compiler_params=pltpu.CompilerParams(
                dimension_semantics=dim_sem,
                vmem_limit_bytes=vmem_limit,
            ),
            cost_estimate=cost,
        )(x2, w1_p, b1_p, w2_p, b2_p, g_p, be_p)

    try:
        out = _run(True)
    except Exception:
        # Fallback for builds where pipeline_mode=pl.Buffered(1) is rejected:
        # default double-buffering of the resident operands (costs VMEM only).
        out = _run(False)

    if aligned_io:
        return out.reshape(batch, seq, d_model)
    return out[:n, :d_model].reshape(batch, seq, d_model)


# --------------------------------------------------------------------------
# Pure-JAX reference and test harness
# --------------------------------------------------------------------------
def _reference(x, w1, b1, w2, b2, gamma, beta, *, eps=1e-5,
               matmul_dtype=jnp.float32):
    h = jnp.dot(x.astype(matmul_dtype), w1.astype(matmul_dtype),
                preferred_element_type=jnp.float32) + b1
    h = jnp.maximum(h, 0.0)
    y = jnp.dot(h.astype(matmul_dtype), w2.astype(matmul_dtype),
                preferred_element_type=jnp.float32) + b2
    z = x + y
    mean = jnp.mean(z, axis=-1, keepdims=True)
    var = jnp.mean((z - mean) ** 2, axis=-1, keepdims=True)
    return (z - mean) / jnp.sqrt(var + eps) * gamma + beta


def _make_params(key, d_model, d_ffn):
    k1, kb1, k2, kb2 = jax.random.split(key, 4)
    lim1 = 1.0 / (d_model ** 0.5)
    lim2 = 1.0 / (d_ffn ** 0.5)
    w1 = jax.random.uniform(k1, (d_model, d_ffn), jnp.float32, -lim1, lim1)
    b1 = jax.random.uniform(kb1, (d_ffn,), jnp.float32, -lim1, lim1)
    w2 = jax.random.uniform(k2, (d_ffn, d_model), jnp.float32, -lim2, lim2)
    b2 = jax.random.uniform(kb2, (d_model,), jnp.float32, -lim2, lim2)
    gamma = jnp.ones((d_model,), jnp.float32)
    beta = jnp.zeros((d_model,), jnp.float32)
    return w1, b1, w2, b2, gamma, beta


def _check(out, x, raw_params, label):
    ref_bf = _reference(x, *raw_params, matmul_dtype=jnp.bfloat16)
    ref_f32 = _reference(x, *raw_params)
    assert jnp.allclose(out, ref_bf, atol=2e-3, rtol=2e-3), \
        f"{label}: mismatch vs bf16-matmul reference"
    assert jnp.allclose(out, ref_f32, atol=5e-2, rtol=5e-2), \
        f"{label}: mismatch vs f32 reference"


if __name__ == "__main__":
    key = jax.random.PRNGKey(0)
    k1, k2, k3, k4, k5, k6 = jax.random.split(key, 6)

    # Test 1: module-scale smoke test (unaligned dims -> pad path, resident).
    batch, seq, d_model, d_ffn = 2, 8, 32, 64
    x = jax.random.normal(k1, (batch, seq, d_model), dtype=jnp.float32)
    raw = _make_params(k2, d_model, d_ffn)
    out = jax.block_until_ready(feed_forward_net(x, *raw))
    assert out.shape == (batch, seq, d_model)
    _check(out, x, raw, "test1 (unaligned, resident)")

    # Test 2: 128-aligned shapes, multi-step parallel row grid, zero-copy I/O.
    batch2, seq2, d_model2, d_ffn2 = 2, 256, 128, 512
    x2 = jax.random.normal(k3, (batch2, seq2, d_model2), dtype=jnp.float32)
    raw2 = _make_params(k4, d_model2, d_ffn2)
    out2 = jax.block_until_ready(feed_forward_net(x2, *raw2, tile_n=128))
    assert out2.shape == (batch2, seq2, d_model2)
    _check(out2, x2, raw2, "test2 (aligned, resident, tiled rows)")

    # Test 3: force the d_ffn-streaming accumulator path (v7x large-model
    # fallback) at small shapes; params prepared once and reused.
    batch3, seq3, d_model3, d_ffn3 = 2, 64, 128, 512
    x3 = jax.random.normal(k5, (batch3, seq3, d_model3), dtype=jnp.float32)
    raw3 = _make_params(k6, d_model3, d_ffn3)
    prepped3 = prepare_params(*raw3)
    out3 = jax.block_until_ready(
        feed_forward_net(x3, params=prepped3, tile_n=64, tile_f=256,
                         force_ffn_tiling=True))
    assert out3.shape == (batch3, seq3, d_model3)
    _check(out3, x3, raw3, "test3 (ffn-tiled accumulator path)")

    print("KERNEL_OK")
</pallas_src>

<mosaic_0001>
module attributes {stable_mosaic.version = 11 : i64} {
  func.func @_ffn_ln_resident_kernel(%arg0: i32, %arg1: memref<16x128xf32, #tpu.memory_space<vmem>>, %arg2: memref<128x128xbf16, #tpu.memory_space<vmem>>, %arg3: memref<1x128xf32, #tpu.memory_space<vmem>>, %arg4: memref<128x128xbf16, #tpu.memory_space<vmem>>, %arg5: memref<1x128xf32, #tpu.memory_space<vmem>>, %arg6: memref<1x128xf32, #tpu.memory_space<vmem>>, %arg7: memref<1x128xf32, #tpu.memory_space<vmem>>, %arg8: memref<16x128xf32, #tpu.memory_space<vmem>>) attributes {dimension_semantics = [#tpu.dimension_semantics<parallel>], iteration_bounds = array<i64: 1>, scalar_prefetch = 0 : i64, scratch_operands = 0 : i64, tpu.core_type = #tpu.core_type<tc>, window_params = [{transform_indices = @transform_0, window_bounds = array<i64: 16, 128>}, {pipeline_mode = #tpu.pipeline_mode<synchronous>, transform_indices = @transform_1, window_bounds = array<i64: 128, 128>}, {pipeline_mode = #tpu.pipeline_mode<synchronous>, transform_indices = @transform_2, window_bounds = array<i64: 1, 128>}, {pipeline_mode = #tpu.pipeline_mode<synchronous>, transform_indices = @transform_3, window_bounds = array<i64: 128, 128>}, {pipeline_mode = #tpu.pipeline_mode<synchronous>, transform_indices = @transform_4, window_bounds = array<i64: 1, 128>}, {pipeline_mode = #tpu.pipeline_mode<synchronous>, transform_indices = @transform_5, window_bounds = array<i64: 1, 128>}, {pipeline_mode = #tpu.pipeline_mode<synchronous>, transform_indices = @transform_6, window_bounds = array<i64: 1, 128>}, {transform_indices = @transform_7, window_bounds = array<i64: 16, 128>}]} {
    %c0 = arith.constant 0 : index
    %c0_0 = arith.constant 0 : index
    %0 = vector.load %arg1[%c0, %c0_0] : memref<16x128xf32, #tpu.memory_space<vmem>>, vector<16x128xf32>
    %1 = arith.truncf %0 : vector<16x128xf32> to vector<16x128xbf16>
    %c0_1 = arith.constant 0 : index
    %c0_2 = arith.constant 0 : index
    %2 = vector.load %arg2[%c0_1, %c0_2] : memref<128x128xbf16, #tpu.memory_space<vmem>>, vector<128x128xbf16>
    %cst = arith.constant dense<0.000000e+00> : vector<16x128xf32>
    %3 = tpu.matmul %1, %2, %cst {dimension_numbers = #tpu.dot_dimension_numbers<[1], [0], [0], [1], [0, 0, 1, 1], [], []>} : vector<16x128xbf16>, vector<128x128xbf16>, vector<16x128xf32> -> vector<16x128xf32>
    %c0_3 = arith.constant 0 : index
    %c0_4 = arith.constant 0 : index
    %4 = vector.load %arg3[%c0_3, %c0_4] : memref<1x128xf32, #tpu.memory_space<vmem>>, vector<1x128xf32>
    %5 = vector.broadcast %4 : vector<1x128xf32> to vector<16x128xf32>
    %6 = arith.addf %3, %5 : vector<16x128xf32>
    %cst_5 = arith.constant 0.000000e+00 : f32
    %7 = vector.broadcast %cst_5 : f32 to vector<16x128xf32>
    %8 = arith.maximumf %6, %7 : vector<16x128xf32>
    %9 = arith.truncf %8 : vector<16x128xf32> to vector<16x128xbf16>
    %c0_6 = arith.constant 0 : index
    %c0_7 = arith.constant 0 : index
    %10 = vector.load %arg4[%c0_6, %c0_7] : memref<128x128xbf16, #tpu.memory_space<vmem>>, vector<128x128xbf16>
    %cst_8 = arith.constant dense<0.000000e+00> : vector<16x128xf32>
    %11 = tpu.matmul %9, %10, %cst_8 {dimension_numbers = #tpu.dot_dimension_numbers<[1], [0], [0], [1], [0, 0, 1, 1], [], []>} : vector<16x128xbf16>, vector<128x128xbf16>, vector<16x128xf32> -> vector<16x128xf32>
    %c0_9 = arith.constant 0 : index
    %c0_10 = arith.constant 0 : index
    %12 = vector.load %arg5[%c0_9, %c0_10] : memref<1x128xf32, #tpu.memory_space<vmem>>, vector<1x128xf32>
    %13 = vector.broadcast %12 : vector<1x128xf32> to vector<16x128xf32>
    %14 = arith.addf %11, %13 : vector<16x128xf32>
    %15 = arith.addf %0, %14 : vector<16x128xf32>
    %c0_11 = arith.constant 0 : index
    %c0_12 = arith.constant 0 : index
    %16 = vector.load %arg6[%c0_11, %c0_12] : memref<1x128xf32, #tpu.memory_space<vmem>>, vector<1x128xf32>
    %c0_13 = arith.constant 0 : index
    %c0_14 = arith.constant 0 : index
    %17 = vector.load %arg7[%c0_13, %c0_14] : memref<1x128xf32, #tpu.memory_space<vmem>>, vector<1x128xf32>
    %cst_15 = arith.constant dense<0.000000e+00> : vector<16xf32>
    %18 = vector.multi_reduction <add>, %15, %cst_15 [1] : vector<16x128xf32> to vector<16xf32>
    %19 = vector.shape_cast %18 : vector<16xf32> to vector<16x1xf32>
    %20 = arith.mulf %15, %15 : vector<16x128xf32>
    %cst_16 = arith.constant dense<0.000000e+00> : vector<16xf32>
    %21 = vector.multi_reduction <add>, %20, %cst_16 [1] : vector<16x128xf32> to vector<16xf32>
    %22 = vector.shape_cast %21 : vector<16xf32> to vector<16x1xf32>
    %cst_17 = arith.constant 3.125000e-02 : f32
    %23 = vector.broadcast %cst_17 : f32 to vector<16x1xf32>
    %24 = arith.mulf %19, %23 : vector<16x1xf32>
    %cst_18 = arith.constant 3.125000e-02 : f32
    %25 = vector.broadcast %cst_18 : f32 to vector<16x1xf32>
    %26 = arith.mulf %22, %25 : vector<16x1xf32>
    %27 = arith.mulf %24, %24 : vector<16x1xf32>
    %28 = arith.subf %26, %27 : vector<16x1xf32>
    %cst_19 = arith.constant 0.000000e+00 : f32
    %29 = vector.broadcast %cst_19 : f32 to vector<16x1xf32>
    %30 = arith.maximumf %28, %29 : vector<16x1xf32>
    %31 = vector.broadcast %24 : vector<16x1xf32> to vector<16x128xf32>
    %32 = arith.subf %15, %31 : vector<16x128xf32>
    %cst_20 = arith.constant 9.99999974E-6 : f32
    %33 = vector.broadcast %cst_20 : f32 to vector<16x1xf32>
    %34 = arith.addf %30, %33 : vector<16x1xf32>
    %35 = math.rsqrt %34 : vector<16x1xf32>
    %36 = vector.broadcast %35 : vector<16x1xf32> to vector<16x128xf32>
    %37 = arith.mulf %32, %36 : vector<16x128xf32>
    %38 = vector.broadcast %16 : vector<1x128xf32> to vector<16x128xf32>
    %39 = arith.mulf %37, %38 : vector<16x128xf32>
    %40 = vector.broadcast %17 : vector<1x128xf32> to vector<16x128xf32>
    %41 = arith.addf %39, %40 : vector<16x128xf32>
    %c0_21 = arith.constant 0 : index
    %c0_22 = arith.constant 0 : index
    %42 = vector.load %arg8[%c0_21, %c0_22] : memref<16x128xf32, #tpu.memory_space<vmem>>, vector<16x128xf32>
    tpu.vector_store %arg8[%c0_21, %c0_22], %41 {strides = array<i32>} : memref<16x128xf32, #tpu.memory_space<vmem>>, vector<16x128xf32>,
    return
  }
  func.func @transform_0(%arg0: i32) -> (i32, i32) {
    %c0_i32 = arith.constant 0 : i32
    %c0_i32_0 = arith.constant 0 : i32
    return %arg0, %c0_i32 : i32, i32
  }
  func.func @transform_1(%arg0: i32) -> (i32, i32) {
    %c0_i32 = arith.constant 0 : i32
    %c0_i32_0 = arith.constant 0 : i32
    %c0_i32_1 = arith.constant 0 : i32
    return %c0_i32, %c0_i32_0 : i32, i32
  }
  func.func @transform_2(%arg0: i32) -> (i32, i32) {
    %c0_i32 = arith.constant 0 : i32
    %c0_i32_0 = arith.constant 0 : i32
    %c0_i32_1 = arith.constant 0 : i32
    return %c0_i32, %c0_i32_0 : i32, i32
  }
  func.func @transform_3(%arg0: i32) -> (i32, i32) {
    %c0_i32 = arith.constant 0 : i32
    %c0_i32_0 = arith.constant 0 : i32
    %c0_i32_1 = arith.constant 0 : i32
    return %c0_i32, %c0_i32_0 : i32, i32
  }
  func.func @transform_4(%arg0: i32) -> (i32, i32) {
    %c0_i32 = arith.constant 0 : i32
    %c0_i32_0 = arith.constant 0 : i32
    %c0_i32_1 = arith.constant 0 : i32
    return %c0_i32, %c0_i32_0 : i32, i32
  }
  func.func @transform_5(%arg0: i32) -> (i32, i32) {
    %c0_i32 = arith.constant 0 : i32
    %c0_i32_0 = arith.constant 0 : i32
    %c0_i32_1 = arith.constant 0 : i32
    return %c0_i32, %c0_i32_0 : i32, i32
  }
  func.func @transform_6(%arg0: i32) -> (i32, i32) {
    %c0_i32 = arith.constant 0 : i32
    %c0_i32_0 = arith.constant 0 : i32
    %c0_i32_1 = arith.constant 0 : i32
    return %c0_i32, %c0_i32_0 : i32, i32
  }
  func.func @transform_7(%arg0: i32) -> (i32, i32) {
    %c0_i32 = arith.constant 0 : i32
    %c0_i32_0 = arith.constant 0 : i32
    return %arg0, %c0_i32 : i32, i32
  }
}

module attributes {stable_mosaic.version = 11 : i64} {
  func.func @_ffn_ln_resident_kernel(%arg0: i32, %arg1: memref<16x128xf32, #tpu.memory_space<vmem>>, %arg2: memref<128x128xbf16, #tpu.memory_space<vmem>>, %arg3: memref<1x128xf32, #tpu.memory_space<vmem>>, %arg4: memref<128x128xbf16, #tpu.memory_space<vmem>>, %arg5: memref<1x128xf32, #tpu.memory_space<vmem>>, %arg6: memref<1x128xf32, #tpu.memory_space<vmem>>, %arg7: memref<1x128xf32, #tpu.memory_space<vmem>>, %arg8: memref<16x128xf32, #tpu.memory_space<vmem>>) attributes {dimension_semantics = [#tpu.dimension_semantics<parallel>], iteration_bounds = array<i64: 1>, scalar_prefetch = 0 : i64, scratch_operands = 0 : i64, tpu.core_type = #tpu.core_type<tc>, window_params = [{transform_indices = @transform_0, window_bounds = array<i64: 16, 128>}, {pipeline_mode = #tpu.pipeline_mode<synchronous>, transform_indices = @transform_1, window_bounds = array<i64: 128, 128>}, {pipeline_mode = #tpu.pipeline_mode<synchronous>, transform_indices = @transform_2, window_bounds = array<i64: 1, 128>}, {pipeline_mode = #tpu.pipeline_mode<synchronous>, transform_indices = @transform_3, window_bounds = array<i64: 128, 128>}, {pipeline_mode = #tpu.pipeline_mode<synchronous>, transform_indices = @transform_4, window_bounds = array<i64: 1, 128>}, {pipeline_mode = #tpu.pipeline_mode<synchronous>, transform_indices = @transform_5, window_bounds = array<i64: 1, 128>}, {pipeline_mode = #tpu.pipeline_mode<synchronous>, transform_indices = @transform_6, window_bounds = array<i64: 1, 128>}, {transform_indices = @transform_7, window_bounds = array<i64: 16, 128>}]} {
    %c0 = arith.constant 0 : index
    %c0_0 = arith.constant 0 : index
    %0 = vector.load %arg1[%c0, %c0_0] : memref<16x128xf32, #tpu.memory_space<vmem>>, vector<16x128xf32>
    %1 = arith.truncf %0 : vector<16x128xf32> to vector<16x128xbf16>
    %c0_1 = arith.constant 0 : index
    %c0_2 = arith.constant 0 : index
    %2 = vector.load %arg2[%c0_1, %c0_2] : memref<128x128xbf16, #tpu.memory_space<vmem>>, vector<128x128xbf16>
    %cst = arith.constant dense<0.000000e+00> : vector<16x128xf32>
    %3 = tpu.matmul %1, %2, %cst {dimension_numbers = #tpu.dot_dimension_numbers<[1], [0], [0], [1], [0, 0, 1, 1], [], []>} : vector<16x128xbf16>, vector<128x128xbf16>, vector<16x128xf32> -> vector<16x128xf32>
    %c0_3 = arith.constant 0 : index
    %c0_4 = arith.constant 0 : index
    %4 = vector.load %arg3[%c0_3, %c0_4] : memref<1x128xf32, #tpu.memory_space<vmem>>, vector<1x128xf32>
    %5 = vector.broadcast %4 : vector<1x128xf32> to vector<16x128xf32>
    %6 = arith.addf %3, %5 : vector<16x128xf32>
    %cst_5 = arith.constant 0.000000e+00 : f32
    %7 = vector.broadcast %cst_5 : f32 to vector<16x128xf32>
    %8 = arith.maximumf %6, %7 : vector<16x128xf32>
    %9 = arith.truncf %8 : vector<16x128xf32> to vector<16x128xbf16>
    %c0_6 = arith.constant 0 : index
    %c0_7 = arith.constant 0 : index
    %10 = vector.load %arg4[%c0_6, %c0_7] : memref<128x128xbf16, #tpu.memory_space<vmem>>, vector<128x128xbf16>
    %cst_8 = arith.constant dense<0.000000e+00> : vector<16x128xf32>
    %11 = tpu.matmul %9, %10, %cst_8 {dimension_numbers = #tpu.dot_dimension_numbers<[1], [0], [0], [1], [0, 0, 1, 1], [], []>} : vector<16x128xbf16>, vector<128x128xbf16>, vector<16x128xf32> -> vector<16x128xf32>
    %c0_9 = arith.constant 0 : index
    %c0_10 = arith.constant 0 : index
    %12 = vector.load %arg5[%c0_9, %c0_10] : memref<1x128xf32, #tpu.memory_space<vmem>>, vector<1x128xf32>
    %13 = vector.broadcast %12 : vector<1x128xf32> to vector<16x128xf32>
    %14 = arith.addf %11, %13 : vector<16x128xf32>
    %15 = arith.addf %0, %14 : vector<16x128xf32>
    %c0_11 = arith.constant 0 : index
    %c0_12 = arith.constant 0 : index
    %16 = vector.load %arg6[%c0_11, %c0_12] : memref<1x128xf32, #tpu.memory_space<vmem>>, vector<1x128xf32>
    %c0_13 = arith.constant 0 : index
    %c0_14 = arith.constant 0 : index
    %17 = vector.load %arg7[%c0_13, %c0_14] : memref<1x128xf32, #tpu.memory_space<vmem>>, vector<1x128xf32>
    %cst_15 = arith.constant dense<0.000000e+00> : vector<16xf32>
    %18 = vector.multi_reduction <add>, %15, %cst_15 [1] : vector<16x128xf32> to vector<16xf32>
    %19 = vector.shape_cast %18 : vector<16xf32> to vector<16x1xf32>
    %20 = arith.mulf %15, %15 : vector<16x128xf32>
    %cst_16 = arith.constant dense<0.000000e+00> : vector<16xf32>
    %21 = vector.multi_reduction <add>, %20, %cst_16 [1] : vector<16x128xf32> to vector<16xf32>
    %22 = vector.shape_cast %21 : vector<16xf32> to vector<16x1xf32>
    %cst_17 = arith.constant 3.125000e-02 : f32
    %23 = vector.broadcast %cst_17 : f32 to vector<16x1xf32>
    %24 = arith.mulf %19, %23 : vector<16x1xf32>
    %cst_18 = arith.constant 3.125000e-02 : f32
    %25 = vector.broadcast %cst_18 : f32 to vector<16x1xf32>
    %26 = arith.mulf %22, %25 : vector<16x1xf32>
    %27 = arith.mulf %24, %24 : vector<16x1xf32>
    %28 = arith.subf %26, %27 : vector<16x1xf32>
    %cst_19 = arith.constant 0.000000e+00 : f32
    %29 = vector.broadcast %cst_19 : f32 to vector<16x1xf32>
    %30 = arith.maximumf %28, %29 : vector<16x1xf32>
    %31 = vector.broadcast %24 : vector<16x1xf32> to vector<16x128xf32>
    %32 = arith.subf %15, %31 : vector<16x128xf32>
    %cst_20 = arith.constant 9.99999974E-6 : f32
    %33 = vector.broadcast %cst_20 : f32 to vector<16x1xf32>
    %34 = arith.addf %30, %33 : vector<16x1xf32>
    %35 = math.rsqrt %34 : vector<16x1xf32>
    %36 = vector.broadcast %35 : vector<16x1xf32> to vector<16x128xf32>
    %37 = arith.mulf %32, %36 : vector<16x128xf32>
    %38 = vector.broadcast %16 : vector<1x128xf32> to vector<16x128xf32>
    %39 = arith.mulf %37, %38 : vector<16x128xf32>
    %40 = vector.broadcast %17 : vector<1x128xf32> to vector<16x128xf32>
    %41 = arith.addf %39, %40 : vector<16x128xf32>
    %c0_21 = arith.constant 0 : index
    %c0_22 = arith.constant 0 : index
    %42 = vector.load %arg8[%c0_21, %c0_22] : memref<16x128xf32, #tpu.memory_space<vmem>>, vector<16x128xf32>
    tpu.vector_store %arg8[%c0_21, %c0_22], %41 {strides = array<i32>} : memref<16x128xf32, #tpu.memory_space<vmem>>, vector<16x128xf32>,
    return
  }
  func.func @transform_0(%arg0: i32) -> (i32, i32) {
    %c0_i32 = arith.constant 0 : i32
    %c0_i32_0 = arith.constant 0 : i32
    return %arg0, %c0_i32 : i32, i32
  }
  func.func @transform_1(%arg0: i32) -> (i32, i32) {
    %c0_i32 = arith.constant 0 : i32
    %c0_i32_0 = arith.constant 0 : i32
    %c0_i32_1 = arith.constant 0 : i32
    return %c0_i32, %c0_i32_0 : i32, i32
  }
  func.func @transform_2(%arg0: i32) -> (i32, i32) {
    %c0_i32 = arith.constant 0 : i32
    %c0_i32_0 = arith.constant 0 : i32
    %c0_i32_1 = arith.constant 0 : i32
    return %c0_i32, %c0_i32_0 : i32, i32
  }
  func.func @transform_3(%arg0: i32) -> (i32, i32) {
    %c0_i32 = arith.constant 0 : i32
    %c0_i32_0 = arith.constant 0 : i32
    %c0_i32_1 = arith.constant 0 : i32
    return %c0_i32, %c0_i32_0 : i32, i32
  }
  func.func @transform_4(%arg0: i32) -> (i32, i32) {
    %c0_i32 = arith.constant 0 : i32
    %c0_i32_0 = arith.constant 0 : i32
    %c0_i32_1 = arith.constant 0 : i32
    return %c0_i32, %c0_i32_0 : i32, i32
  }
  func.func @transform_5(%arg0: i32) -> (i32, i32) {
    %c0_i32 = arith.constant 0 : i32
    %c0_i32_0 = arith.constant 0 : i32
    %c0_i32_1 = arith.constant 0 : i32
    return %c0_i32, %c0_i32_0 : i32, i32
  }
  func.func @transform_6(%arg0: i32) -> (i32, i32) {
    %c0_i32 = arith.constant 0 : i32
    %c0_i32_0 = arith.constant 0 : i32
    %c0_i32_1 = arith.constant 0 : i32
    return %c0_i32, %c0_i32_0 : i32, i32
  }
  func.func @transform_7(%arg0: i32) -> (i32, i32) {
    %c0_i32 = arith.constant 0 : i32
    %c0_i32_0 = arith.constant 0 : i32
    return %arg0, %c0_i32 : i32, i32
  }
}

</mosaic_0001>

<llo_original>
// kernel: tpu_custom_call.1
$region0: #{tpu_custom_call.1}
  #allocation0 [shape = 'u32[]', space=smem, size = 0x4, offset = 0x4, fixed_abs, tag = 'smem constant byte address 0x4 - core index']
  #allocation1 [shape = 'u32[144,128]{1,0:T(1,128)}', space=vmem, size = 0x12000, scoped, tag = 'internal scratch']
  %s0 = inlined_call_operand.hbm [shape: f32[16,128], index: 0, kind: input, shape index: {}]
  %s1 = inlined_call_operand.hbm [shape: bf16[128,128], index: 1, kind: input, shape index: {}]
  %s2 = inlined_call_operand.vmem [shape: f32[1,128], index: 2, kind: input, shape index: {}]
  %s3 = inlined_call_operand.hbm [shape: bf16[128,128], index: 3, kind: input, shape index: {}]
  %s4 = inlined_call_operand.vmem [shape: f32[1,128], index: 4, kind: input, shape index: {}]
  %s5 = inlined_call_operand.vmem [shape: f32[1,128], index: 5, kind: input, shape index: {}]
  %s6 = inlined_call_operand.vmem [shape: f32[1,128], index: 6, kind: input, shape index: {}]
  %s7 = inlined_call_operand.hbm [shape: f32[16,128], index: 7, kind: output, shape index: {}]
  %s8 = sld [smem:[#allocation0]]
  $region50: #{tpu_custom_call.1} parent=0
    _
  %s10 = ssub.s32 1, %s8
  %s11 = scalar_select 0, %s10, %s8
  $region1: #{tpu_custom_call.1} parent=0
    #allocation2 [shape = 'u8[8192]{0}', space=vmem, size = 0x2000, scoped, tag = 'input window, operand 0, single buffered']
    #allocation3 [shape = 's32[1]{0}', space=sflag, size = 0x4, scoped, tag = 'scoped memory for tpu_custom_call.1']
    #allocation4 [shape = 's32[1]{0}', space=sflag, size = 0x4, scoped, tag = 'scoped memory for tpu_custom_call.1']
    #allocation5 [shape = 'u8[32768]{0}', space=vmem, size = 0x8000, scoped, tag = 'input window, operand 1, single buffered']
    #allocation6 [shape = 's32[1]{0}', space=sflag, size = 0x4, scoped, tag = 'scoped memory for tpu_custom_call.1']
    #allocation7 [shape = 'u8[32768]{0}', space=vmem, size = 0x8000, scoped, tag = 'input window, operand 3, single buffered']
    #allocation8 [shape = 'u8[8192]{0}', space=vmem, size = 0x2000, scoped, tag = 'output window, operand 0, single buffered']
    %12 = vsyncpa [#allocation3], 0
    %13 = vsyncpa [#allocation6], 0
    %14 = vsyncpa [#allocation4], 0
    // Predicated region
    $region2: #{tpu_custom_call.1} parent=1 // pred_check
      _
    $region3: #{tpu_custom_call.1} parent=1 // pred_check_branch
      %16 = sbr.rel (0) target = $region5
    $region4: #{tpu_custom_call.1} parent=1 // pred_region
      %s18 = ssub.s32 256, 256
      %19 = vsyncadd [#allocation3], %s18
      %s20 = sshll.u32 [#allocation2], 4
      %s21 = int_to_ptr.vmem [resolvable:$true] %s20
      %26 = dma.hbm_to_vmem [thread:$0]  %s0, 256, %s21, [#allocation3], 128, 128, 8
    $region5: #{tpu_custom_call.1} parent=1 // pred_fallthru
      _
    // Predicated region
    $region6: #{tpu_custom_call.1} parent=1 // pred_check
      _
    $region7: #{tpu_custom_call.1} parent=1 // pred_check_branch
      %28 = sbr.rel (0) target = $region9
    $region8: #{tpu_custom_call.1} parent=1 // pred_region
      %s30 = ssub.s32 1024, 1024
      %31 = vsyncadd [#allocation6], %s30
      %s32 = sshll.u32 [#allocation5], 4
      %s33 = int_to_ptr.vmem [resolvable:$true] %s32
      %38 = dma.hbm_to_vmem [thread:$0]  %s1, 1024, %s33, [#allocation6], 64, 64, 4
    $region9: #{tpu_custom_call.1} parent=1 // pred_fallthru
      _
    // Predicated region
    $region10: #{tpu_custom_call.1} parent=1 // pred_check
      _
    $region11: #{tpu_custom_call.1} parent=1 // pred_check_branch
      %40 = sbr.rel (0) target = $region13
    $region12: #{tpu_custom_call.1} parent=1 // pred_region
      _
    $region13: #{tpu_custom_call.1} parent=1 // pred_fallthru
      _
    // Predicated region
    $region14: #{tpu_custom_call.1} parent=1 // pred_check
      _
    $region15: #{tpu_custom_call.1} parent=1 // pred_check_branch
      %42 = sbr.rel (0) target = $region17
    $region16: #{tpu_custom_call.1} parent=1 // pred_region
      %s44 = ssub.s32 1024, 1024
      %45 = vsyncadd [#allocation6], %s44
      %s46 = sshll.u32 [#allocation7], 4
      %s47 = int_to_ptr.vmem [resolvable:$true] %s46
      %52 = dma.hbm_to_vmem [thread:$0]  %s3, 1024, %s47, [#allocation6], 64, 64, 4
    $region17: #{tpu_custom_call.1} parent=1 // pred_fallthru
      _
    // Predicated region
    $region18: #{tpu_custom_call.1} parent=1 // pred_check
      _
    $region19: #{tpu_custom_call.1} parent=1 // pred_check_branch
      %54 = sbr.rel (0) target = $region21
    $region20: #{tpu_custom_call.1} parent=1 // pred_region
      _
    $region21: #{tpu_custom_call.1} parent=1 // pred_fallthru
      _
    // Predicated region
    $region22: #{tpu_custom_call.1} parent=1 // pred_check
      _
    $region23: #{tpu_custom_call.1} parent=1 // pred_check_branch
      %56 = sbr.rel (0) target = $region25
    $region24: #{tpu_custom_call.1} parent=1 // pred_region
      _
    $region25: #{tpu_custom_call.1} parent=1 // pred_fallthru
      _
    // Predicated region
    $region26: #{tpu_custom_call.1} parent=1 // pred_check
      _
    $region27: #{tpu_custom_call.1} parent=1 // pred_check_branch
      %58 = sbr.rel (0) target = $region29
    $region28: #{tpu_custom_call.1} parent=1 // pred_region
      _
    $region29: #{tpu_custom_call.1} parent=1 // pred_fallthru
      _
    // Predicated region
    $region30: #{tpu_custom_call.1} parent=1 // pred_check
      _
    $region31: #{tpu_custom_call.1} parent=1 // pred_check_branch
      %60 = sbr.rel (0) target = $region33
    $region32: #{tpu_custom_call.1} parent=1 // pred_region
      %61 = dma.done [#allocation3], 256
    $region33: #{tpu_custom_call.1} parent=1 // pred_fallthru
      _
    // Predicated region
    $region34: #{tpu_custom_call.1} parent=1 // pred_check
      _
    $region35: #{tpu_custom_call.1} parent=1 // pred_check_branch
      %63 = sbr.rel (0) target = $region37
    $region36: #{tpu_custom_call.1} parent=1 // pred_region
      %64 = dma.done [#allocation6], 1024
    $region37: #{tpu_custom_call.1} parent=1 // pred_fallthru
      _
    // Predicated region
    $region38: #{tpu_custom_call.1} parent=1 // pred_check
      _
    $region39: #{tpu_custom_call.1} parent=1 // pred_check_branch
      %66 = sbr.rel (0) target = $region41
    $region40: #{tpu_custom_call.1} parent=1 // pred_region
      %67 = dma.done [#allocation6], 1024
    $region41: #{tpu_custom_call.1} parent=1 // pred_fallthru
      _
    %v69 = vld [vmem:[#allocation2] sm:$0xff]
    %v70 = vld [vmem:[#allocation2 + $0x8] sm:$0xff]
    %v71 = vpack.c.bf16 %v70, %v69
    %v72 = vld [vmem:[#allocation5] sm:$0xf]
    %v73 = vld [vmem:[#allocation5 + $0x4] sm:$0xf]
    %v74 = vld [vmem:[#allocation5 + $0x8] sm:$0xf]
    %v75 = vld [vmem:[#allocation5 + $0xc] sm:$0xf]
    %v76 = vld [vmem:[#allocation5 + $0x10] sm:$0xf]
    %v77 = vld [vmem:[#allocation5 + $0x14] sm:$0xf]
    %v78 = vld [vmem:[#allocation5 + $0x18] sm:$0xf]
    %v79 = vld [vmem:[#allocation5 + $0x1c] sm:$0xf]
    %v80 = vld [vmem:[#allocation5 + $0x20] sm:$0xf]
    %v81 = vld [vmem:[#allocation5 + $0x24] sm:$0xf]
    %v82 = vld [vmem:[#allocation5 + $0x28] sm:$0xf]
    %v83 = vld [vmem:[#allocation5 + $0x2c] sm:$0xf]
    %v84 = vld [vmem:[#allocation5 + $0x30] sm:$0xf]
    %v85 = vld [vmem:[#allocation5 + $0x34] sm:$0xf]
    %v86 = vld [vmem:[#allocation5 + $0x38] sm:$0xf]
    %v87 = vld [vmem:[#allocation5 + $0x3c] sm:$0xf]
    %v88 = vld [vmem:[%s2] sm:$0x1]
    %v90 = vlaneseq
    %v91 = vshrl.u32 %v90, 7
    %v92 = vsub.s32 0, %v91
    %v93 = vrot.slane %v88, %v92
    %v111 = vunpack.c.l.b16 %v72
    %v112 = vunpack.c.l.b16 %v73
    %v113 = vunpack.c.l.b16 %v74
    %v114 = vunpack.c.l.b16 %v75
    %v115 = vunpack.c.l.b16 %v76
    %v116 = vunpack.c.l.b16 %v77
    %v117 = vunpack.c.l.b16 %v78
    %v118 = vunpack.c.l.b16 %v79
    %v119 = vunpack.c.l.b16 %v80
    %v120 = vunpack.c.l.b16 %v81
    %v121 = vunpack.c.l.b16 %v82
    %v122 = vunpack.c.l.b16 %v83
    %v123 = vunpack.c.l.b16 %v84
    %v124 = vunpack.c.l.b16 %v85
    %v125 = vunpack.c.l.b16 %v86
    %v126 = vunpack.c.l.b16 %v87
    %v127 = vpack.c.b16 %v112, %v111
    %v128 = vpack.c.b16 %v114, %v113
    %v129 = vpack.c.b16 %v116, %v115
    %v130 = vpack.c.b16 %v118, %v117
    %v131 = vpack.c.b16 %v120, %v119
    %v132 = vpack.c.b16 %v122, %v121
    %v133 = vpack.c.b16 %v124, %v123
    %v134 = vpack.c.b16 %v126, %v125
    %143 = vmatprep.subr.bf16.mxu0 0
    %144 = vmatpush1.bf16.msra.mxu0 %v127
    %145 = vmatprep.subr.bf16.mxu0 0
    %146 = vmatpush1.bf16.msra.mxu0 %v128
    %147 = vmatprep.subr.bf16.mxu0 0
    %148 = vmatpush1.bf16.msra.mxu0 %v129
    %149 = vmatprep.subr.bf16.mxu0 0
    %150 = vmatpush1.bf16.msra.mxu0 %v130
    %151 = vmatprep.subr.bf16.mxu0 0
    %152 = vmatpush1.bf16.msra.mxu0 %v131
    %153 = vmatprep.subr.bf16.mxu0 0
    %154 = vmatpush1.bf16.msra.mxu0 %v132
    %155 = vmatprep.subr.bf16.mxu0 0
    %156 = vmatpush1.bf16.msra.mxu0 %v133
    %157 = vmatprep.subr.bf16.mxu0 0
    %158 = vmatpush1.bf16.msra.mxu0 %v134
    %159 = vmatprep.subr.bf16.mxu0 0
    %160 = vmatpush1.bf16.msra.mxu0 0
    %161 = vmatprep.subr.bf16.mxu0 0
    %162 = vmatpush1.bf16.msra.mxu0 0
    %163 = vmatprep.subr.bf16.mxu0 0
    %164 = vmatpush1.bf16.msra.mxu0 0
    %165 = vmatprep.subr.bf16.mxu0 0
    %166 = vmatpush1.bf16.msra.mxu0 0
    %167 = vmatprep.subr.bf16.mxu0 0
    %168 = vmatpush1.bf16.msra.mxu0 0
    %169 = vmatprep.subr.bf16.mxu0 0
    %170 = vmatpush1.bf16.msra.mxu0 0
    %171 = vmatprep.subr.bf16.mxu0 0
    %172 = vmatpush1.bf16.msra.mxu0 0
    %173 = vmatprep.subr.bf16.mxu0 0
    %174 = vmatpush1.bf16.msra.mxu0 0
    %175 = vmatprep.mubr.bf16.mxu0 0
    %176 = vmatmul.mubr.bf16.gmra.mrb[0].mxu0 %v71
    %v177 = vpop.f32.mrb[0].mxu0
    %v178 = vadd.f32 %v93, %v177
    %v179 = vpop.f32.mrb[0].mxu0
    %v180 = vpop.f32.mrb[0].mxu0
    %v181 = vadd.f32 %v93, %v180
    %v182 = vpop.f32.mrb[0].mxu0
    %183 = vdwg.mxu0
    %v184 = vmax.f32 %v178, 0.0
    %v185 = vmax.f32 %v181, 0.0
    %v186 = vpack.c.bf16 %v185, %v184
    %v187 = vld [vmem:[#allocation7] sm:$0xf]
    %v188 = vld [vmem:[#allocation7 + $0x4] sm:$0xf]
    %v189 = vld [vmem:[#allocation7 + $0x8] sm:$0xf]
    %v190 = vld [vmem:[#allocation7 + $0xc] sm:$0xf]
    %v191 = vld [vmem:[#allocation7 + $0x10] sm:$0xf]
    %v192 = vld [vmem:[#allocation7 + $0x14] sm:$0xf]
    %v193 = vld [vmem:[#allocation7 + $0x18] sm:$0xf]
    %v194 = vld [vmem:[#allocation7 + $0x1c] sm:$0xf]
    %v195 = vld [vmem:[#allocation7 + $0x20] sm:$0xf]
    %v196 = vld [vmem:[#allocation7 + $0x24] sm:$0xf]
    %v197 = vld [vmem:[#allocation7 + $0x28] sm:$0xf]
    %v198 = vld [vmem:[#allocation7 + $0x2c] sm:$0xf]
    %v199 = vld [vmem:[#allocation7 + $0x30] sm:$0xf]
    %v200 = vld [vmem:[#allocation7 + $0x34] sm:$0xf]
    %v201 = vld [vmem:[#allocation7 + $0x38] sm:$0xf]
    %v202 = vld [vmem:[#allocation7 + $0x3c] sm:$0xf]
    %v203 = vld [vmem:[%s4] sm:$0x1]
    %v205 = vlaneseq
    %v206 = vshrl.u32 %v205, 7
    %v207 = vsub.s32 0, %v206
    %v208 = vrot.slane %v203, %v207
    %v226 = vunpack.c.l.b16 %v187
    %v227 = vunpack.c.l.b16 %v188
    %v228 = vunpack.c.l.b16 %v189
    %v229 = vunpack.c.l.b16 %v190
    %v230 = vunpack.c.l.b16 %v191
    %v231 = vunpack.c.l.b16 %v192
    %v232 = vunpack.c.l.b16 %v193
    %v233 = vunpack.c.l.b16 %v194
    %v234 = vunpack.c.l.b16 %v195
    %v235 = vunpack.c.l.b16 %v196
    %v236 = vunpack.c.l.b16 %v197
    %v237 = vunpack.c.l.b16 %v198
    %v238 = vunpack.c.l.b16 %v199
    %v239 = vunpack.c.l.b16 %v200
    %v240 = vunpack.c.l.b16 %v201
    %v241 = vunpack.c.l.b16 %v202
    %v242 = vpack.c.b16 %v227, %v226
    %v243 = vpack.c.b16 %v229, %v228
    %v244 = vpack.c.b16 %v231, %v230
    %v245 = vpack.c.b16 %v233, %v232
    %v246 = vpack.c.b16 %v235, %v234
    %v247 = vpack.c.b16 %v237, %v236
    %v248 = vpack.c.b16 %v239, %v238
    %v249 = vpack.c.b16 %v241, %v240
    %258 = vmatprep.subr.bf16.mxu0 0
    %259 = vmatpush1.bf16.msra.mxu0 %v242
    %260 = vmatprep.subr.bf16.mxu0 0
    %261 = vmatpush1.bf16.msra.mxu0 %v243
    %262 = vmatprep.subr.bf16.mxu0 0
    %263 = vmatpush1.bf16.msra.mxu0 %v244
    %264 = vmatprep.subr.bf16.mxu0 0
    %265 = vmatpush1.bf16.msra.mxu0 %v245
    %266 = vmatprep.subr.bf16.mxu0 0
    %267 = vmatpush1.bf16.msra.mxu0 %v246
    %268 = vmatprep.subr.bf16.mxu0 0
    %269 = vmatpush1.bf16.msra.mxu0 %v247
    %270 = vmatprep.subr.bf16.mxu0 0
    %271 = vmatpush1.bf16.msra.mxu0 %v248
    %272 = vmatprep.subr.bf16.mxu0 0
    %273 = vmatpush1.bf16.msra.mxu0 %v249
    %274 = vmatprep.subr.bf16.mxu0 0
    %275 = vmatpush1.bf16.msra.mxu0 0
    %276 = vmatprep.subr.bf16.mxu0 0
    %277 = vmatpush1.bf16.msra.mxu0 0
    %278 = vmatprep.subr.bf16.mxu0 0
    %279 = vmatpush1.bf16.msra.mxu0 0
    %280 = vmatprep.subr.bf16.mxu0 0
    %281 = vmatpush1.bf16.msra.mxu0 0
    %282 = vmatprep.subr.bf16.mxu0 0
    %283 = vmatpush1.bf16.msra.mxu0 0
    %284 = vmatprep.subr.bf16.mxu0 0
    %285 = vmatpush1.bf16.msra.mxu0 0
    %286 = vmatprep.subr.bf16.mxu0 0
    %287 = vmatpush1.bf16.msra.mxu0 0
    %288 = vmatprep.subr.bf16.mxu0 0
    %289 = vmatpush1.bf16.msra.mxu0 0
    %290 = vmatprep.mubr.bf16.mxu0 0
    %291 = vmatmul.mubr.bf16.gmra.mrb[0].mxu0 %v186
    %v292 = vpop.f32.mrb[0].mxu0
    %v293 = vadd.f32 %v208, %v292
    %v294 = vpop.f32.mrb[0].mxu0
    %v295 = vpop.f32.mrb[0].mxu0
    %v296 = vadd.f32 %v208, %v295
    %v297 = vpop.f32.mrb[0].mxu0
    %298 = vdwg.mxu0
    %v299 = vadd.f32 %v69, %v293
    %v300 = vadd.f32 %v70, %v296
    %v301 = vld [vmem:[%s5] sm:$0x1]
    %v302 = vld [vmem:[%s6] sm:$0x1]
    %303 = vadd.xlane.f32.xlu0 %v299
    %v304 = vpop.xlane.xlu0 %303
    %305 = vadd.xlane.f32.xlu0 %v300
    %v306 = vpop.xlane.xlu0 %305
    %v307 = vmul.f32 %v299, %v299
    %v308 = vmul.f32 %v300, %v300
    %309 = vadd.xlane.f32.xlu0 %v307
    %v310 = vpop.xlane.xlu0 %309
    %311 = vadd.xlane.f32.xlu0 %v308
    %v312 = vpop.xlane.xlu0 %311
    %v313 = vmul.f32 %v304, 0.03125
    %v314 = vmul.f32 %v306, 0.03125
    %v315 = vmul.f32 %v310, 0.03125
    %v316 = vmul.f32 %v312, 0.03125
    %v317 = vmul.f32 %v313, %v313
    %v318 = vmul.f32 %v314, %v314
    %v319 = vsub.f32 %v315, %v317
    %v320 = vsub.f32 %v316, %v318
    %v321 = vmax.f32 %v319, 0.0
    %v322 = vmax.f32 %v320, 0.0
    %v323 = vsub.f32 %v299, %v313
    %v324 = vsub.f32 %v300, %v314
    %v325 = vadd.f32 %v321, 1e-05
    %v326 = vadd.f32 %v322, 1e-05
    %v327 = vrsqrt.pop %v325
    %v328 = vrsqrt.pop %v326
    %v329 = vmul.f32 %v323, %v327
    %v330 = vmul.f32 %v324, %v328
    %v332 = vlaneseq
    %v333 = vshrl.u32 %v332, 7
    %v334 = vsub.s32 0, %v333
    %v335 = vrot.slane %v301, %v334
    %v337 = vmul.f32 %v329, %v335
    %v338 = vmul.f32 %v330, %v335
    %v340 = vlaneseq
    %v341 = vshrl.u32 %v340, 7
    %v342 = vsub.s32 0, %v341
    %v343 = vrot.slane %v302, %v342
    %v345 = vadd.f32 %v337, %v343
    %v346 = vadd.f32 %v338, %v343
    %347 = vst [vmem:[#allocation8] sm:$0xff] %v345
    %348 = vst [vmem:[#allocation8 + $0x8] sm:$0xff] %v346
    // Predicated region
    $region42: #{tpu_custom_call.1} parent=1 // pred_check
      _
    $region43: #{tpu_custom_call.1} parent=1 // pred_check_branch
      %350 = sbr.rel (0) target = $region45
    $region44: #{tpu_custom_call.1} parent=1 // pred_region
      %s352 = ssub.s32 256, 256
      %353 = vsyncadd [#allocation4], %s352
      %s354 = sshll.u32 [#allocation8], 4
      %s355 = int_to_ptr.vmem [resolvable:$true] %s354
      %360 = dma.vmem_to_hbm [thread:$0]  %s355, 256, %s7, [#allocation4], 128, 128, 8
    $region45: #{tpu_custom_call.1} parent=1 // pred_fallthru
      _
    // Predicated region
    $region46: #{tpu_custom_call.1} parent=1 // pred_check
      _
    $region47: #{tpu_custom_call.1} parent=1 // pred_check_branch
      %362 = sbr.rel (0) target = $region49
    $region48: #{tpu_custom_call.1} parent=1 // pred_region
      %363 = dma.done [#allocation4], 256
    $region49: #{tpu_custom_call.1} parent=1 // pred_fallthru
      _
    %364 = vsyncpa [#allocation3], 1
    %365 = vsyncpa [#allocation6], 1
    %366 = vsyncpa [#allocation4], 1

// kernel: tpu_custom_call.1
$region0: #{tpu_custom_call.1}
  #allocation0 [shape = 'u32[]', space=smem, size = 0x4, offset = 0x4, fixed_abs, tag = 'smem constant byte address 0x4 - core index']
  #allocation1 [shape = 'u32[144,128]{1,0:T(1,128)}', space=vmem, size = 0x12000, scoped, tag = 'internal scratch']
  %s0 = inlined_call_operand.hbm [shape: f32[16,128], index: 0, kind: input, shape index: {}]
  %s1 = inlined_call_operand.hbm [shape: bf16[128,128], index: 1, kind: input, shape index: {}]
  %s2 = inlined_call_operand.vmem [shape: f32[1,128], index: 2, kind: input, shape index: {}]
  %s3 = inlined_call_operand.hbm [shape: bf16[128,128], index: 3, kind: input, shape index: {}]
  %s4 = inlined_call_operand.vmem [shape: f32[1,128], index: 4, kind: input, shape index: {}]
  %s5 = inlined_call_operand.vmem [shape: f32[1,128], index: 5, kind: input, shape index: {}]
  %s6 = inlined_call_operand.vmem [shape: f32[1,128], index: 6, kind: input, shape index: {}]
  %s7 = inlined_call_operand.hbm [shape: f32[16,128], index: 7, kind: output, shape index: {}]
  %s8 = sld [smem:[#allocation0]]
  $region50: #{tpu_custom_call.1} parent=0
    _
  %s10 = ssub.s32 1, %s8
  %s11 = scalar_select 0, %s10, %s8
  $region1: #{tpu_custom_call.1} parent=0
    #allocation2 [shape = 'u8[8192]{0}', space=vmem, size = 0x2000, scoped, tag = 'input window, operand 0, single buffered']
    #allocation3 [shape = 's32[1]{0}', space=sflag, size = 0x4, scoped, tag = 'scoped memory for tpu_custom_call.1']
    #allocation4 [shape = 's32[1]{0}', space=sflag, size = 0x4, scoped, tag = 'scoped memory for tpu_custom_call.1']
    #allocation5 [shape = 'u8[32768]{0}', space=vmem, size = 0x8000, scoped, tag = 'input window, operand 1, single buffered']
    #allocation6 [shape = 's32[1]{0}', space=sflag, size = 0x4, scoped, tag = 'scoped memory for tpu_custom_call.1']
    #allocation7 [shape = 'u8[32768]{0}', space=vmem, size = 0x8000, scoped, tag = 'input window, operand 3, single buffered']
    #allocation8 [shape = 'u8[8192]{0}', space=vmem, size = 0x2000, scoped, tag = 'output window, operand 0, single buffered']
    %12 = vsyncpa [#allocation3], 0
    %13 = vsyncpa [#allocation6], 0
    %14 = vsyncpa [#allocation4], 0
    // Predicated region
    $region2: #{tpu_custom_call.1} parent=1 // pred_check
      _
    $region3: #{tpu_custom_call.1} parent=1 // pred_check_branch
      %16 = sbr.rel (0) target = $region5
    $region4: #{tpu_custom_call.1} parent=1 // pred_region
      %s18 = ssub.s32 256, 256
      %19 = vsyncadd [#allocation3], %s18
      %s20 = sshll.u32 [#allocation2], 4
      %s21 = int_to_ptr.vmem [resolvable:$true] %s20
      %26 = dma.hbm_to_vmem [thread:$0]  %s0, 256, %s21, [#allocation3], 128, 128, 8
    $region5: #{tpu_custom_call.1} parent=1 // pred_fallthru
      _
    // Predicated region
    $region6: #{tpu_custom_call.1} parent=1 // pred_check
      _
    $region7: #{tpu_custom_call.1} parent=1 // pred_check_branch
      %28 = sbr.rel (0) target = $region9
    $region8: #{tpu_custom_call.1} parent=1 // pred_region
      %s30 = ssub.s32 1024, 1024
      %31 = vsyncadd [#allocation6], %s30
      %s32 = sshll.u32 [#allocation5], 4
      %s33 = int_to_ptr.vmem [resolvable:$true] %s32
      %38 = dma.hbm_to_vmem [thread:$0]  %s1, 1024, %s33, [#allocation6], 64, 64, 4
    $region9: #{tpu_custom_call.1} parent=1 // pred_fallthru
      _
    // Predicated region
    $region10: #{tpu_custom_call.1} parent=1 // pred_check
      _
    $region11: #{tpu_custom_call.1} parent=1 // pred_check_branch
      %40 = sbr.rel (0) target = $region13
    $region12: #{tpu_custom_call.1} parent=1 // pred_region
      _
    $region13: #{tpu_custom_call.1} parent=1 // pred_fallthru
      _
    // Predicated region
    $region14: #{tpu_custom_call.1} parent=1 // pred_check
      _
    $region15: #{tpu_custom_call.1} parent=1 // pred_check_branch
      %42 = sbr.rel (0) target = $region17
    $region16: #{tpu_custom_call.1} parent=1 // pred_region
      %s44 = ssub.s32 1024, 1024
      %45 = vsyncadd [#allocation6], %s44
      %s46 = sshll.u32 [#allocation7], 4
      %s47 = int_to_ptr.vmem [resolvable:$true] %s46
      %52 = dma.hbm_to_vmem [thread:$0]  %s3, 1024, %s47, [#allocation6], 64, 64, 4
    $region17: #{tpu_custom_call.1} parent=1 // pred_fallthru
      _
    // Predicated region
    $region18: #{tpu_custom_call.1} parent=1 // pred_check
      _
    $region19: #{tpu_custom_call.1} parent=1 // pred_check_branch
      %54 = sbr.rel (0) target = $region21
    $region20: #{tpu_custom_call.1} parent=1 // pred_region
      _
    $region21: #{tpu_custom_call.1} parent=1 // pred_fallthru
      _
    // Predicated region
    $region22: #{tpu_custom_call.1} parent=1 // pred_check
      _
    $region23: #{tpu_custom_call.1} parent=1 // pred_check_branch
      %56 = sbr.rel (0) target = $region25
    $region24: #{tpu_custom_call.1} parent=1 // pred_region
      _
    $region25: #{tpu_custom_call.1} parent=1 // pred_fallthru
      _
    // Predicated region
    $region26: #{tpu_custom_call.1} parent=1 // pred_check
      _
    $region27: #{tpu_custom_call.1} parent=1 // pred_check_branch
      %58 = sbr.rel (0) target = $region29
    $region28: #{tpu_custom_call.1} parent=1 // pred_region
      _
    $region29: #{tpu_custom_call.1} parent=1 // pred_fallthru
      _
    // Predicated region
    $region30: #{tpu_custom_call.1} parent=1 // pred_check
      _
    $region31: #{tpu_custom_call.1} parent=1 // pred_check_branch
      %60 = sbr.rel (0) target = $region33
    $region32: #{tpu_custom_call.1} parent=1 // pred_region
      %61 = dma.done [#allocation3], 256
    $region33: #{tpu_custom_call.1} parent=1 // pred_fallthru
      _
    // Predicated region
    $region34: #{tpu_custom_call.1} parent=1 // pred_check
      _
    $region35: #{tpu_custom_call.1} parent=1 // pred_check_branch
      %63 = sbr.rel (0) target = $region37
    $region36: #{tpu_custom_call.1} parent=1 // pred_region
      %64 = dma.done [#allocation6], 1024
    $region37: #{tpu_custom_call.1} parent=1 // pred_fallthru
      _
    // Predicated region
    $region38: #{tpu_custom_call.1} parent=1 // pred_check
      _
    $region39: #{tpu_custom_call.1} parent=1 // pred_check_branch
      %66 = sbr.rel (0) target = $region41
    $region40: #{tpu_custom_call.1} parent=1 // pred_region
      %67 = dma.done [#allocation6], 1024
    $region41: #{tpu_custom_call.1} parent=1 // pred_fallthru
      _
    %v69 = vld [vmem:[#allocation2] sm:$0xff]
    %v70 = vld [vmem:[#allocation2 + $0x8] sm:$0xff]
    %v71 = vpack.c.bf16 %v70, %v69
    %v72 = vld [vmem:[#allocation5] sm:$0xf]
    %v73 = vld [vmem:[#allocation5 + $0x4] sm:$0xf]
    %v74 = vld [vmem:[#allocation5 + $0x8] sm:$0xf]
    %v75 = vld [vmem:[#allocation5 + $0xc] sm:$0xf]
    %v76 = vld [vmem:[#allocation5 + $0x10] sm:$0xf]
    %v77 = vld [vmem:[#allocation5 + $0x14] sm:$0xf]
    %v78 = vld [vmem:[#allocation5 + $0x18] sm:$0xf]
    %v79 = vld [vmem:[#allocation5 + $0x1c] sm:$0xf]
    %v80 = vld [vmem:[#allocation5 + $0x20] sm:$0xf]
    %v81 = vld [vmem:[#allocation5 + $0x24] sm:$0xf]
    %v82 = vld [vmem:[#allocation5 + $0x28] sm:$0xf]
    %v83 = vld [vmem:[#allocation5 + $0x2c] sm:$0xf]
    %v84 = vld [vmem:[#allocation5 + $0x30] sm:$0xf]
    %v85 = vld [vmem:[#allocation5 + $0x34] sm:$0xf]
    %v86 = vld [vmem:[#allocation5 + $0x38] sm:$0xf]
    %v87 = vld [vmem:[#allocation5 + $0x3c] sm:$0xf]
    %v88 = vld [vmem:[%s2] sm:$0x1]
    %v90 = vlaneseq
    %v91 = vshrl.u32 %v90, 7
    %v92 = vsub.s32 0, %v91
    %v93 = vrot.slane %v88, %v92
    %v111 = vunpack.c.l.b16 %v72
    %v112 = vunpack.c.l.b16 %v73
    %v113 = vunpack.c.l.b16 %v74
    %v114 = vunpack.c.l.b16 %v75
    %v115 = vunpack.c.l.b16 %v76
    %v116 = vunpack.c.l.b16 %v77
    %v117 = vunpack.c.l.b16 %v78
    %v118 = vunpack.c.l.b16 %v79
    %v119 = vunpack.c.l.b16 %v80
    %v120 = vunpack.c.l.b16 %v81
    %v121 = vunpack.c.l.b16 %v82
    %v122 = vunpack.c.l.b16 %v83
    %v123 = vunpack.c.l.b16 %v84
    %v124 = vunpack.c.l.b16 %v85
    %v125 = vunpack.c.l.b16 %v86
    %v126 = vunpack.c.l.b16 %v87
    %v127 = vpack.c.b16 %v112, %v111
    %v128 = vpack.c.b16 %v114, %v113
    %v129 = vpack.c.b16 %v116, %v115
    %v130 = vpack.c.b16 %v118, %v117
    %v131 = vpack.c.b16 %v120, %v119
    %v132 = vpack.c.b16 %v122, %v121
    %v133 = vpack.c.b16 %v124, %v123
    %v134 = vpack.c.b16 %v126, %v125
    %143 = vmatprep.subr.bf16.mxu0 0
    %144 = vmatpush1.bf16.msra.mxu0 %v127
    %145 = vmatprep.subr.bf16.mxu0 0
    %146 = vmatpush1.bf16.msra.mxu0 %v128
    %147 = vmatprep.subr.bf16.mxu0 0
    %148 = vmatpush1.bf16.msra.mxu0 %v129
    %149 = vmatprep.subr.bf16.mxu0 0
    %150 = vmatpush1.bf16.msra.mxu0 %v130
    %151 = vmatprep.subr.bf16.mxu0 0
    %152 = vmatpush1.bf16.msra.mxu0 %v131
    %153 = vmatprep.subr.bf16.mxu0 0
    %154 = vmatpush1.bf16.msra.mxu0 %v132
    %155 = vmatprep.subr.bf16.mxu0 0
    %156 = vmatpush1.bf16.msra.mxu0 %v133
    %157 = vmatprep.subr.bf16.mxu0 0
    %158 = vmatpush1.bf16.msra.mxu0 %v134
    %159 = vmatprep.subr.bf16.mxu0 0
    %160 = vmatpush1.bf16.msra.mxu0 0
    %161 = vmatprep.subr.bf16.mxu0 0
    %162 = vmatpush1.bf16.msra.mxu0 0
    %163 = vmatprep.subr.bf16.mxu0 0
    %164 = vmatpush1.bf16.msra.mxu0 0
    %165 = vmatprep.subr.bf16.mxu0 0
    %166 = vmatpush1.bf16.msra.mxu0 0
    %167 = vmatprep.subr.bf16.mxu0 0
    %168 = vmatpush1.bf16.msra.mxu0 0
    %169 = vmatprep.subr.bf16.mxu0 0
    %170 = vmatpush1.bf16.msra.mxu0 0
    %171 = vmatprep.subr.bf16.mxu0 0
    %172 = vmatpush1.bf16.msra.mxu0 0
    %173 = vmatprep.subr.bf16.mxu0 0
    %174 = vmatpush1.bf16.msra.mxu0 0
    %175 = vmatprep.mubr.bf16.mxu0 0
    %176 = vmatmul.mubr.bf16.gmra.mrb[0].mxu0 %v71
    %v177 = vpop.f32.mrb[0].mxu0
    %v178 = vadd.f32 %v93, %v177
    %v179 = vpop.f32.mrb[0].mxu0
    %v180 = vpop.f32.mrb[0].mxu0
    %v181 = vadd.f32 %v93, %v180
    %v182 = vpop.f32.mrb[0].mxu0
    %183 = vdwg.mxu0
    %v184 = vmax.f32 %v178, 0.0
    %v185 = vmax.f32 %v181, 0.0
    %v186 = vpack.c.bf16 %v185, %v184
    %v187 = vld [vmem:[#allocation7] sm:$0xf]
    %v188 = vld [vmem:[#allocation7 + $0x4] sm:$0xf]
    %v189 = vld [vmem:[#allocation7 + $0x8] sm:$0xf]
    %v190 = vld [vmem:[#allocation7 + $0xc] sm:$0xf]
    %v191 = vld [vmem:[#allocation7 + $0x10] sm:$0xf]
    %v192 = vld [vmem:[#allocation7 + $0x14] sm:$0xf]
    %v193 = vld [vmem:[#allocation7 + $0x18] sm:$0xf]
    %v194 = vld [vmem:[#allocation7 + $0x1c] sm:$0xf]
    %v195 = vld [vmem:[#allocation7 + $0x20] sm:$0xf]
    %v196 = vld [vmem:[#allocation7 + $0x24] sm:$0xf]
    %v197 = vld [vmem:[#allocation7 + $0x28] sm:$0xf]
    %v198 = vld [vmem:[#allocation7 + $0x2c] sm:$0xf]
    %v199 = vld [vmem:[#allocation7 + $0x30] sm:$0xf]
    %v200 = vld [vmem:[#allocation7 + $0x34] sm:$0xf]
    %v201 = vld [vmem:[#allocation7 + $0x38] sm:$0xf]
    %v202 = vld [vmem:[#allocation7 + $0x3c] sm:$0xf]
    %v203 = vld [vmem:[%s4] sm:$0x1]
    %v205 = vlaneseq
    %v206 = vshrl.u32 %v205, 7
    %v207 = vsub.s32 0, %v206
    %v208 = vrot.slane %v203, %v207
    %v226 = vunpack.c.l.b16 %v187
    %v227 = vunpack.c.l.b16 %v188
    %v228 = vunpack.c.l.b16 %v189
    %v229 = vunpack.c.l.b16 %v190
    %v230 = vunpack.c.l.b16 %v191
    %v231 = vunpack.c.l.b16 %v192
    %v232 = vunpack.c.l.b16 %v193
    %v233 = vunpack.c.l.b16 %v194
    %v234 = vunpack.c.l.b16 %v195
    %v235 = vunpack.c.l.b16 %v196
    %v236 = vunpack.c.l.b16 %v197
    %v237 = vunpack.c.l.b16 %v198
    %v238 = vunpack.c.l.b16 %v199
    %v239 = vunpack.c.l.b16 %v200
    %v240 = vunpack.c.l.b16 %v201
    %v241 = vunpack.c.l.b16 %v202
    %v242 = vpack.c.b16 %v227, %v226
    %v243 = vpack.c.b16 %v229, %v228
    %v244 = vpack.c.b16 %v231, %v230
    %v245 = vpack.c.b16 %v233, %v232
    %v246 = vpack.c.b16 %v235, %v234
    %v247 = vpack.c.b16 %v237, %v236
    %v248 = vpack.c.b16 %v239, %v238
    %v249 = vpack.c.b16 %v241, %v240
    %258 = vmatprep.subr.bf16.mxu0 0
    %259 = vmatpush1.bf16.msra.mxu0 %v242
    %260 = vmatprep.subr.bf16.mxu0 0
    %261 = vmatpush1.bf16.msra.mxu0 %v243
    %262 = vmatprep.subr.bf16.mxu0 0
    %263 = vmatpush1.bf16.msra.mxu0 %v244
    %264 = vmatprep.subr.bf16.mxu0 0
    %265 = vmatpush1.bf16.msra.mxu0 %v245
    %266 = vmatprep.subr.bf16.mxu0 0
    %267 = vmatpush1.bf16.msra.mxu0 %v246
    %268 = vmatprep.subr.bf16.mxu0 0
    %269 = vmatpush1.bf16.msra.mxu0 %v247
    %270 = vmatprep.subr.bf16.mxu0 0
    %271 = vmatpush1.bf16.msra.mxu0 %v248
    %272 = vmatprep.subr.bf16.mxu0 0
    %273 = vmatpush1.bf16.msra.mxu0 %v249
    %274 = vmatprep.subr.bf16.mxu0 0
    %275 = vmatpush1.bf16.msra.mxu0 0
    %276 = vmatprep.subr.bf16.mxu0 0
    %277 = vmatpush1.bf16.msra.mxu0 0
    %278 = vmatprep.subr.bf16.mxu0 0
    %279 = vmatpush1.bf16.msra.mxu0 0
    %280 = vmatprep.subr.bf16.mxu0 0
    %281 = vmatpush1.bf16.msra.mxu0 0
    %282 = vmatprep.subr.bf16.mxu0 0
    %283 = vmatpush1.bf16.msra.mxu0 0
    %284 = vmatprep.subr.bf16.mxu0 0
    %285 = vmatpush1.bf16.msra.mxu0 0
    %286 = vmatprep.subr.bf16.mxu0 0
    %287 = vmatpush1.bf16.msra.mxu0 0
    %288 = vmatprep.subr.bf16.mxu0 0
    %289 = vmatpush1.bf16.msra.mxu0 0
    %290 = vmatprep.mubr.bf16.mxu0 0
    %291 = vmatmul.mubr.bf16.gmra.mrb[0].mxu0 %v186
    %v292 = vpop.f32.mrb[0].mxu0
    %v293 = vadd.f32 %v208, %v292
    %v294 = vpop.f32.mrb[0].mxu0
    %v295 = vpop.f32.mrb[0].mxu0
    %v296 = vadd.f32 %v208, %v295
    %v297 = vpop.f32.mrb[0].mxu0
    %298 = vdwg.mxu0
    %v299 = vadd.f32 %v69, %v293
    %v300 = vadd.f32 %v70, %v296
    %v301 = vld [vmem:[%s5] sm:$0x1]
    %v302 = vld [vmem:[%s6] sm:$0x1]
    %303 = vadd.xlane.f32.xlu0 %v299
    %v304 = vpop.xlane.xlu0 %303
    %305 = vadd.xlane.f32.xlu0 %v300
    %v306 = vpop.xlane.xlu0 %305
    %v307 = vmul.f32 %v299, %v299
    %v308 = vmul.f32 %v300, %v300
    %309 = vadd.xlane.f32.xlu0 %v307
    %v310 = vpop.xlane.xlu0 %309
    %311 = vadd.xlane.f32.xlu0 %v308
    %v312 = vpop.xlane.xlu0 %311
    %v313 = vmul.f32 %v304, 0.03125
    %v314 = vmul.f32 %v306, 0.03125
    %v315 = vmul.f32 %v310, 0.03125
    %v316 = vmul.f32 %v312, 0.03125
    %v317 = vmul.f32 %v313, %v313
    %v318 = vmul.f32 %v314, %v314
    %v319 = vsub.f32 %v315, %v317
    %v320 = vsub.f32 %v316, %v318
    %v321 = vmax.f32 %v319, 0.0
    %v322 = vmax.f32 %v320, 0.0
    %v323 = vsub.f32 %v299, %v313
    %v324 = vsub.f32 %v300, %v314
    %v325 = vadd.f32 %v321, 1e-05
    %v326 = vadd.f32 %v322, 1e-05
    %v327 = vrsqrt.pop %v325
    %v328 = vrsqrt.pop %v326
    %v329 = vmul.f32 %v323, %v327
    %v330 = vmul.f32 %v324, %v328
    %v332 = vlaneseq
    %v333 = vshrl.u32 %v332, 7
    %v334 = vsub.s32 0, %v333
    %v335 = vrot.slane %v301, %v334
    %v337 = vmul.f32 %v329, %v335
    %v338 = vmul.f32 %v330, %v335
    %v340 = vlaneseq
    %v341 = vshrl.u32 %v340, 7
    %v342 = vsub.s32 0, %v341
    %v343 = vrot.slane %v302, %v342
    %v345 = vadd.f32 %v337, %v343
    %v346 = vadd.f32 %v338, %v343
    %347 = vst [vmem:[#allocation8] sm:$0xff] %v345
    %348 = vst [vmem:[#allocation8 + $0x8] sm:$0xff] %v346
    // Predicated region
    $region42: #{tpu_custom_call.1} parent=1 // pred_check
      _
    $region43: #{tpu_custom_call.1} parent=1 // pred_check_branch
      %350 = sbr.rel (0) target = $region45
    $region44: #{tpu_custom_call.1} parent=1 // pred_region
      %s352 = ssub.s32 256, 256
      %353 = vsyncadd [#allocation4], %s352
      %s354 = sshll.u32 [#allocation8], 4
      %s355 = int_to_ptr.vmem [resolvable:$true] %s354
      %360 = dma.vmem_to_hbm [thread:$0]  %s355, 256, %s7, [#allocation4], 128, 128, 8
    $region45: #{tpu_custom_call.1} parent=1 // pred_fallthru
      _
    // Predicated region
    $region46: #{tpu_custom_call.1} parent=1 // pred_check
      _
    $region47: #{tpu_custom_call.1} parent=1 // pred_check_branch
      %362 = sbr.rel (0) target = $region49
    $region48: #{tpu_custom_call.1} parent=1 // pred_region
      %363 = dma.done [#allocation4], 256
    $region49: #{tpu_custom_call.1} parent=1 // pred_fallthru
      _
    %364 = vsyncpa [#allocation3], 1
    %365 = vsyncpa [#allocation6], 1
    %366 = vsyncpa [#allocation4], 1

</llo_original>
